<compile_context>
chip_gen: v5e
topology: v5e:2x2
jax: 0.10.0
libtpu: 0.0.40
codegen_flags: <defaults>
</compile_context>

<pallas_src>
import functools

import jax
import jax.numpy as jnp
from jax.experimental import pallas as pl
from jax.experimental.pallas import tpu as pltpu


def _sublane_quantum(dtype):
    """Row-tile quantum honoring sublane packing (8 f32 / 16 bf16 / 32 int8)."""
    itemsize = jnp.dtype(dtype).itemsize
    return 8 * max(1, 4 // max(itemsize, 1))


# ---------------------------------------------------------------------------
# Fused single-pass kernel: pool -> gate -> scale for one batch element.
# ---------------------------------------------------------------------------
def _fused_kernel(w_ref, b_ref, x_ref, o_ref):
    # w_ref: (C, C) conv weight pre-scaled by 1/HW (f32); b_ref: (C, 1) f32.
    # x_ref / o_ref: (C, HW) slab of one batch element.
    x = x_ref[...]
    # Global-average-pool numerator: exact f32 cross-lane reduction (XLU).
    sums = jnp.sum(x.astype(jnp.float32), axis=-1, keepdims=True)       # (C, 1)
    # 1x1 conv on the pooled vector == dense matvec (1/HW already folded in).
    logits = jnp.dot(w_ref[...], sums,
                     preferred_element_type=jnp.float32) + b_ref[...]   # (C, 1)
    gate = jax.nn.sigmoid(logits)
    # NOTE: gate is cast to the activation dtype before the multiply; for bf16
    # inputs this differs from PyTorch's f32 broadcast by <= 1 ulp(bf16).
    o_ref[...] = x * gate.astype(x.dtype)


# ---------------------------------------------------------------------------
# Fallback pass 1: tiled, masked spatial-sum reduction (ragged lane tiles).
# ---------------------------------------------------------------------------
def _pool_kernel(x_ref, s_ref, *, hw, lane_tile):
    # x_ref: (TR, TL) tile; s_ref: (TR, 1) f32 accumulator resident across the
    # lane ("arbitrary") grid axis.  Last lane tile may be ragged -> mask OOB
    # lanes so garbage reads cannot corrupt the sum.
    t = pl.program_id(1)

    @pl.when(t == 0)
    def _():
        s_ref[...] = jnp.zeros_like(s_ref)

    xt = x_ref[...].astype(jnp.float32)
    lane = jax.lax.broadcasted_iota(jnp.int32, xt.shape, 1) + t * lane_tile
    xt = jnp.where(lane < hw, xt, 0.0)
    s_ref[...] += jnp.sum(xt, axis=-1, keepdims=True)


# ---------------------------------------------------------------------------
# Fallback pass 2: elementwise broadcast scale, out = x * gate.
# ---------------------------------------------------------------------------
def _scale_kernel(g_ref, x_ref, o_ref):
    # g_ref: (TR, 1) gate in the activation dtype; x_ref/o_ref: (TR, TL).
    # Ragged edge blocks are safe here: OOB lanes only feed masked stores.
    o_ref[...] = x_ref[...] * g_ref[...]


def ese_module(x, weight, bias, *, row_tile=512, block_bytes=4 << 20,
               fused_vmem_budget=24 << 20):
    """ESE forward.  x: (N,C,H,W); weight: (C,C) or (C,C,1,1); bias: (C,)."""
    N, C, H, W = x.shape
    HW = H * W
    itemsize = jnp.dtype(x.dtype).itemsize

    w2 = weight.reshape(C, C).astype(jnp.float32)
    # Fold the 1/HW of the average pool into the gate weight (host-side, tiny).
    w_scaled = w2 * (1.0 / HW)
    b_col = bias.astype(jnp.float32).reshape(C, 1)

    x3 = x.reshape(N, C, HW)            # free reshape (contiguous layout)

    # ---------------- fused single-pass path --------------------------------
    slab_bytes = C * HW * itemsize
    fused_footprint = 4 * slab_bytes + 8 * C * C + 8 * C   # dbl-buffered in+out
    if fused_footprint <= fused_vmem_budget:
        vmem_limit = int(min(48 << 20, max(8 << 20, 2 * fused_footprint)))
        out3 = pl.pallas_call(
            _fused_kernel,
            out_shape=jax.ShapeDtypeStruct((N, C, HW), x.dtype),
            grid=(N,),
            in_specs=[
                pl.BlockSpec((C, C), lambda n: (0, 0)),
                pl.BlockSpec((C, 1), lambda n: (0, 0)),
                pl.BlockSpec((None, C, HW), lambda n: (n, 0, 0)),
            ],
            out_specs=pl.BlockSpec((None, C, HW), lambda n: (n, 0, 0)),
            compiler_params=pltpu.CompilerParams(
                dimension_semantics=("parallel",),
                vmem_limit_bytes=vmem_limit),
        )(w_scaled, b_col, x3)
        return out3.reshape(N, C, H, W)

    # ---------------- fallback: two-pass, ragged grids (huge slabs) ---------
    R = N * C
    x2 = x.reshape(R, HW)

    rq = _sublane_quantum(x.dtype)
    if R <= row_tile:
        # Give the "parallel" row axis >= 2 blocks when possible (v7x: 2 TCs).
        tr = R if R < 2 * rq else ((R // 2 + rq - 1) // rq) * rq
    else:
        tr = row_tile
    target_lanes = max(128, (block_bytes // (tr * itemsize)) // 128 * 128)
    tl = HW if HW <= target_lanes else int(target_lanes)
    grid = (pl.cdiv(R, tr), pl.cdiv(HW, tl))
    vmem_limit = 48 << 20

    # pass 1: per-(batch, channel) spatial sums in f32.
    sums = pl.pallas_call(
        functools.partial(_pool_kernel, hw=HW, lane_tile=tl),
        out_shape=jax.ShapeDtypeStruct((R, 1), jnp.float32),
        grid=grid,
        in_specs=[pl.BlockSpec((tr, tl), lambda i, t: (i, t))],
        out_specs=pl.BlockSpec((tr, 1), lambda i, t: (i, 0)),
        compiler_params=pltpu.CompilerParams(
            dimension_semantics=("parallel", "arbitrary"),
            vmem_limit_bytes=vmem_limit),
    )(x2)

    # gate: microscopic (N,C)x(C,C) problem -> plain XLA at full precision.
    pooled = sums.reshape(N, C)
    logits = jnp.dot(pooled, w_scaled.T,
                     precision=jax.lax.Precision.HIGHEST) + bias.astype(jnp.float32)
    gate = jax.nn.sigmoid(logits).astype(x.dtype).reshape(R, 1)

    # pass 2: out = x * gate (broadcast over lanes), lane-dense stores.
    out2 = pl.pallas_call(
        _scale_kernel,
        out_shape=jax.ShapeDtypeStruct((R, HW), x.dtype),
        grid=grid,
        in_specs=[
            pl.BlockSpec((tr, 1), lambda i, t: (i, 0)),     # gate column
            pl.BlockSpec((tr, tl), lambda i, t: (i, t)),    # identity tile
        ],
        out_specs=pl.BlockSpec((tr, tl), lambda i, t: (i, t)),
        compiler_params=pltpu.CompilerParams(
            dimension_semantics=("parallel", "parallel"),
            vmem_limit_bytes=vmem_limit),
    )(gate, x2)
    return out2.reshape(N, C, H, W)


if __name__ == "__main__":
    key = jax.random.PRNGKey(0)
    k_x, k_w, k_b = jax.random.split(key, 3)

    N, C, H, W = 2, 4, 16, 16
    x = jax.random.normal(k_x, (N, C, H, W), dtype=jnp.float32)
    # Conv2d(C, C, kernel_size=1) weight: (C, C, 1, 1).
    weight = jax.random.normal(k_w, (C, C, 1, 1), dtype=jnp.float32) * 0.1
    bias = jax.random.normal(k_b, (C,), dtype=jnp.float32) * 0.1

    # Pure-JAX reference.
    pooled = jnp.mean(x, axis=(2, 3))                                   # (N, C)
    logits = jnp.dot(pooled, weight.reshape(C, C).T,
                     precision=jax.lax.Precision.HIGHEST) + bias        # (N, C)
    ref = jax.nn.sigmoid(logits)[:, :, None, None] * x                  # (N,C,H,W)

    # Fused single-pass path (default for ESE-sized slabs).
    out = ese_module(x, weight, bias)
    jax.block_until_ready(out)
    assert jnp.allclose(out, ref, atol=1e-5, rtol=1e-5), "fused path mismatch"

    # Also exercise the large-slab fallback (two-pass, ragged grids) path.
    out_fb = ese_module(x, weight, bias, fused_vmem_budget=0)
    jax.block_until_ready(out_fb)
    assert jnp.allclose(out_fb, ref, atol=1e-5, rtol=1e-5), "fallback path mismatch"

    print("KERNEL_OK")
</pallas_src>

<mosaic_0001>
module attributes {stable_mosaic.version = 11 : i64} {
  func.func @_fused_kernel(%arg0: i32, %arg1: memref<4x4xf32, #tpu.memory_space<vmem>>, %arg2: memref<4x1xf32, #tpu.memory_space<vmem>>, %arg3: memref<1x4x256xf32, #tpu.memory_space<vmem>>, %arg4: memref<1x4x256xf32, #tpu.memory_space<vmem>>) attributes {dimension_semantics = [#tpu.dimension_semantics<parallel>], iteration_bounds = array<i64: 2>, scalar_prefetch = 0 : i64, scratch_operands = 0 : i64, tpu.core_type = #tpu.core_type<tc>, window_params = [{pipeline_mode = #tpu.pipeline_mode<synchronous>, transform_indices = @transform_0, window_bounds = array<i64: 4, 4>}, {pipeline_mode = #tpu.pipeline_mode<synchronous>, transform_indices = @transform_1, window_bounds = array<i64: 4, 1>}, {transform_indices = @transform_2, window_bounds = array<i64: 1, 4, 256>}, {transform_indices = @transform_3, window_bounds = array<i64: 1, 4, 256>}]} {
    %c0 = arith.constant 0 : index
    %c0_0 = arith.constant 0 : index
    %c0_1 = arith.constant 0 : index
    %0 = vector.load %arg3[%c0, %c0_0, %c0_1] : memref<1x4x256xf32, #tpu.memory_space<vmem>>, vector<1x4x256xf32>
    %1 = vector.shape_cast %0 : vector<1x4x256xf32> to vector<4x256xf32>
    %cst = arith.constant dense<0.000000e+00> : vector<4xf32>
    %2 = vector.multi_reduction <add>, %1, %cst [1] : vector<4x256xf32> to vector<4xf32>
    %3 = vector.shape_cast %2 : vector<4xf32> to vector<4x1xf32>
    %c0_2 = arith.constant 0 : index
    %c0_3 = arith.constant 0 : index
    %4 = vector.load %arg1[%c0_2, %c0_3] : memref<4x4xf32, #tpu.memory_space<vmem>>, vector<4x4xf32>
    %cst_4 = arith.constant dense<0.000000e+00> : vector<4x1xf32>
    %5 = tpu.matmul %4, %3, %cst_4 {dimension_numbers = #tpu.dot_dimension_numbers<[1], [0], [0], [1], [0, 0, 1, 1], [], []>} : vector<4x4xf32>, vector<4x1xf32>, vector<4x1xf32> -> vector<4x1xf32>
    %c0_5 = arith.constant 0 : index
    %c0_6 = arith.constant 0 : index
    %6 = vector.load %arg2[%c0_5, %c0_6] : memref<4x1xf32, #tpu.memory_space<vmem>>, vector<4x1xf32>
    %7 = arith.addf %5, %6 : vector<4x1xf32>
    %8 = arith.negf %7 : vector<4x1xf32>
    %9 = math.exp %8 : vector<4x1xf32>
    %cst_7 = arith.constant 1.000000e+00 : f32
    %10 = vector.broadcast %cst_7 : f32 to vector<4x1xf32>
    %11 = arith.addf %10, %9 : vector<4x1xf32>
    %12 = arith.divf %10, %11 : vector<4x1xf32>
    %13 = vector.broadcast %12 : vector<4x1xf32> to vector<4x256xf32>
    %14 = arith.mulf %1, %13 : vector<4x256xf32>
    %c0_8 = arith.constant 0 : index
    %c0_9 = arith.constant 0 : index
    %c0_10 = arith.constant 0 : index
    %15 = vector.load %arg4[%c0_8, %c0_9, %c0_10] : memref<1x4x256xf32, #tpu.memory_space<vmem>>, vector<1x4x256xf32>
    %16 = vector.shape_cast %15 : vector<1x4x256xf32> to vector<4x256xf32>
    %17 = vector.shape_cast %14 : vector<4x256xf32> to vector<1x4x256xf32>
    tpu.vector_store %arg4[%c0_8, %c0_9, %c0_10], %17 {strides = array<i32>} : memref<1x4x256xf32, #tpu.memory_space<vmem>>, vector<1x4x256xf32>,
    return
  }
  func.func @transform_0(%arg0: i32) -> (i32, i32) {
    %c0_i32 = arith.constant 0 : i32
    %c0_i32_0 = arith.constant 0 : i32
    %c0_i32_1 = arith.constant 0 : i32
    return %c0_i32, %c0_i32_0 : i32, i32
  }
  func.func @transform_1(%arg0: i32) -> (i32, i32) {
    %c0_i32 = arith.constant 0 : i32
    %c0_i32_0 = arith.constant 0 : i32
    %c0_i32_1 = arith.constant 0 : i32
    return %c0_i32, %c0_i32_0 : i32, i32
  }
  func.func @transform_2(%arg0: i32) -> (i32, i32, i32) {
    %c0_i32 = arith.constant 0 : i32
    %c0_i32_0 = arith.constant 0 : i32
    %c0_i32_1 = arith.constant 0 : i32
    return %arg0, %c0_i32, %c0_i32_0 : i32, i32, i32
  }
  func.func @transform_3(%arg0: i32) -> (i32, i32, i32) {
    %c0_i32 = arith.constant 0 : i32
    %c0_i32_0 = arith.constant 0 : i32
    %c0_i32_1 = arith.constant 0 : i32
    return %arg0, %c0_i32, %c0_i32_0 : i32, i32, i32
  }
}

</mosaic_0001>

<llo_original>
// kernel: tpu_custom_call.1
$region0: #{tpu_custom_call.1}
  #allocation0 [shape = 'u32[]', space=smem, size = 0x4, offset = 0x4, fixed_abs, tag = 'smem constant byte address 0x4 - core index']
  #allocation1 [shape = 'u32[72,128]{1,0:T(1,128)}', space=vmem, size = 0x9000, scoped, tag = 'internal scratch']
  %s0 = inlined_call_operand.vmem [shape: f32[4,4], index: 0, kind: input, shape index: {}]
  %s1 = inlined_call_operand.vmem [shape: f32[4,1], index: 1, kind: input, shape index: {}]
  %s2 = inlined_call_operand.hbm [shape: f32[2,4,256], index: 2, kind: input, shape index: {}]
  %s3 = inlined_call_operand.hbm [shape: f32[2,4,256], index: 3, kind: output, shape index: {}]
  %s4 = sld [smem:[#allocation0]]
  $region49: #{tpu_custom_call.1} parent=0
    _
  %s6 = ssub.s32 1, %s4
  %s7 = scalar_select 0, %s6, %s4
  $region1: #{tpu_custom_call.1} parent=0
    #allocation2 [shape = 'u8[8192]{0}', space=vmem, size = 0x2000, scoped, tag = 'input window, operand 2']
    #allocation3 [shape = 's32[2]{0}', space=sflag, size = 0x8, scoped, tag = 'scoped memory for tpu_custom_call.1']
    #allocation4 [shape = 's32[2]{0}', space=sflag, size = 0x8, scoped, tag = 'scoped memory for tpu_custom_call.1']
    #allocation5 [shape = 'u8[8192]{0}', space=vmem, size = 0x2000, scoped, tag = 'output window, operand 0']
    %8 = vsyncpa [#allocation3], 0
    %s9 = scalar_lea.sflag [#allocation3], 1
    %10 = vsyncpa %s9, 0
    %11 = vsyncpa [#allocation4], 0
    %s12 = scalar_lea.sflag [#allocation4], 1
    %13 = vsyncpa %s12, 0
    loop: start=0, step=1, limit=4
    $region2: #{tpu_custom_call.1} parent=1 // loop_pre_header
      _
    $region3: #{tpu_custom_call.1} parent=1 // loop_header
      %s15 = sphi 0, %s19
      %p16 = scmp.ge.s32.totalorder %s15, 4
      %s23 = sphi 0, %s23
      %s25 = sphi 0, %s23
      %s26 = sphi 0, %s25
      %s40 = sphi 0, %s26
      %s44 = sphi 0, %s44
      %s46 = sphi 0, %s44
      %s47 = sphi 0, %s46
      %s61 = sphi 0, %s47
      %s67 = sphi 0, %s69
      %s70 = sphi 0, %s67
      %s71 = sphi 0, %s70
      %s87 = sphi 0, %s71
      %s93 = sphi 0, %s95
      %s96 = sphi 0, %s93
      %s97 = sphi 0, %s96
      %s113 = sphi 0, %s97
    $region4: #{tpu_custom_call.1} parent=1 // loop_header_branch
      %18 = sbr.rel (%p16) target = $region8
    $region5: #{tpu_custom_call.1} parent=1 // loop_body
      %s20 = ssub.s32 %s15, 1
      %s21 = ssub.s32 %s15, 2
      %s22 = sadd.s32 %s15, 1
      %s24 = sadd.s32 %s23, 1
      %p27 = scmp.eq.s32.totalorder %s15, 1
      %p28 = scmp.ne.s32.totalorder %s23, %s25
      %p29 = scmp.eq.s32.totalorder %s15, 0
      %p30 = por %p28, %p29
      %p31 = scmp.ne.s32.totalorder %s23, %s25
      %p32 = scmp.eq.s32.totalorder %s20, 1
      %p33 = por %p31, %p32
      %p34 = scmp.ne.s32.totalorder %s25, %s26
      %p35 = scmp.eq.s32.totalorder %s20, 0
      %p36 = por %p34, %p35
      %p37 = scmp.ne.s32.totalorder %s25, %s26
      %p38 = scmp.eq.s32.totalorder %s21, 1
      %p39 = por %p37, %p38
      %p41 = scmp.ne.s32.totalorder %s26, %s40
      %p42 = scmp.eq.s32.totalorder %s21, 0
      %p43 = por %p41, %p42
      %s45 = sadd.s32 %s44, 1
      %p48 = scmp.eq.s32.totalorder %s15, 1
      %p49 = scmp.ne.s32.totalorder %s44, %s46
      %p50 = scmp.eq.s32.totalorder %s15, 0
      %p51 = por %p49, %p50
      %p52 = scmp.ne.s32.totalorder %s44, %s46
      %p53 = scmp.eq.s32.totalorder %s20, 1
      %p54 = por %p52, %p53
      %p55 = scmp.ne.s32.totalorder %s46, %s47
      %p56 = scmp.eq.s32.totalorder %s20, 0
      %p57 = por %p55, %p56
      %p58 = scmp.ne.s32.totalorder %s46, %s47
      %p59 = scmp.eq.s32.totalorder %s21, 1
      %p60 = por %p58, %p59
      %p62 = scmp.ne.s32.totalorder %s47, %s61
      %p63 = scmp.eq.s32.totalorder %s21, 0
      %p64 = por %p62, %p63
      %s65 = ssub.s32 %s15, %s22
      %p66 = scmp.eq.s32.totalorder %s65, 0
      %s68 = sadd.s32 %s67, 1
      %s69 = scalar_select %p66, %s67, %s68
      %p72 = pneg %p66
      %p73 = scmp.eq.s32.totalorder %s15, 1
      %p74 = por %p72, %p73
      %p75 = scmp.ne.s32.totalorder %s67, %s70
      %p76 = scmp.eq.s32.totalorder %s15, 0
      %p77 = por %p75, %p76
      %p78 = scmp.ne.s32.totalorder %s67, %s70
      %p79 = scmp.eq.s32.totalorder %s20, 1
      %p80 = por %p78, %p79
      %p81 = scmp.ne.s32.totalorder %s70, %s71
      %p82 = scmp.eq.s32.totalorder %s20, 0
      %p83 = por %p81, %p82
      %p84 = scmp.ne.s32.totalorder %s70, %s71
      %p85 = scmp.eq.s32.totalorder %s21, 1
      %p86 = por %p84, %p85
      %p88 = scmp.ne.s32.totalorder %s71, %s87
      %p89 = scmp.eq.s32.totalorder %s21, 0
      %p90 = por %p88, %p89
      %s91 = ssub.s32 %s15, %s22
      %p92 = scmp.eq.s32.totalorder %s91, 0
      %s94 = sadd.s32 %s93, 1
      %s95 = scalar_select %p92, %s93, %s94
      %p98 = pneg %p92
      %p99 = scmp.eq.s32.totalorder %s15, 1
      %p100 = por %p98, %p99
      %p101 = scmp.ne.s32.totalorder %s93, %s96
      %p102 = scmp.eq.s32.totalorder %s15, 0
      %p103 = por %p101, %p102
      %p104 = scmp.ne.s32.totalorder %s93, %s96
      %p105 = scmp.eq.s32.totalorder %s20, 1
      %p106 = por %p104, %p105
      %p107 = scmp.ne.s32.totalorder %s96, %s97
      %p108 = scmp.eq.s32.totalorder %s20, 0
      %p109 = por %p107, %p108
      %p110 = scmp.ne.s32.totalorder %s96, %s97
      %p111 = scmp.eq.s32.totalorder %s21, 1
      %p112 = por %p110, %p111
      %p114 = scmp.ne.s32.totalorder %s97, %s113
      %p115 = scmp.eq.s32.totalorder %s21, 0
      %p116 = por %p114, %p115
      %p117 = scmp.le.s32.totalorder 1, %s15
      %p118 = scmp.lt.s32.totalorder %s15, 3
      %p119 = pnand %p117, %p118
      %p120 = pneg %p119
      // Predicated region
      $region9: #{tpu_custom_call.1} parent=5 // pred_check
        _
      $region10: #{tpu_custom_call.1} parent=5 // pred_check_branch
        %122 = sbr.rel (%p119) target = $region12
      $region11: #{tpu_custom_call.1} parent=5 // pred_region
        %s123 = ssub.s32 %s15, 1
        // Predicated region
        $region13: #{tpu_custom_call.1} parent=11 // pred_check
          %p124 = pneg %p36
        $region14: #{tpu_custom_call.1} parent=11 // pred_check_branch
          %126 = sbr.rel (%p124) target = $region16
        $region15: #{tpu_custom_call.1} parent=11 // pred_region
          _
        $region16: #{tpu_custom_call.1} parent=11 // pred_fallthru
          _
        // Predicated region
        $region17: #{tpu_custom_call.1} parent=11 // pred_check
          %p127 = pneg %p57
        $region18: #{tpu_custom_call.1} parent=11 // pred_check_branch
          %129 = sbr.rel (%p127) target = $region20
        $region19: #{tpu_custom_call.1} parent=11 // pred_region
          _
        $region20: #{tpu_custom_call.1} parent=11 // pred_fallthru
          _
      $region12: #{tpu_custom_call.1} parent=5 // pred_fallthru
        _
      %p130 = scmp.lt.s32.totalorder %s15, 2
      // Predicated region
      $region21: #{tpu_custom_call.1} parent=5 // pred_check
        %p131 = pneg %p130
      $region22: #{tpu_custom_call.1} parent=5 // pred_check_branch
        %133 = sbr.rel (%p131) target = $region24
      $region23: #{tpu_custom_call.1} parent=5 // pred_region
        // Predicated region
        $region25: #{tpu_custom_call.1} parent=23 // pred_check
          %p134 = pneg %p77
        $region26: #{tpu_custom_call.1} parent=23 // pred_check_branch
          %136 = sbr.rel (%p134) target = $region28
        $region27: #{tpu_custom_call.1} parent=23 // pred_region
          %s137 = sand.u32 %s67, 1
          %s138 = scalar_lea.sflag [#allocation3], %s137
          %s139 = sand.u32 %s67, 1
          %s140 = smul.addr %s139, 8
          %s141 = scalar_lea.vmem [#allocation2], %s140
          %143 = vsyncadd %s138, 0
          %s144 = smul.addr %s15, 2
          %s145 = smul.addr %s144, 4
          %s146 = scalar_lea.hbm %s2, %s145
          %s148 = sshll.u32 %s146, 4
          %s149 = int_to_ptr.hbm [resolvable:$true] %s148
          %s150 = sshll.u32 %s141, 4
          %s151 = int_to_ptr.vmem [resolvable:$true] %s150
          %153 = dma.hbm_to_vmem [thread:$0]  %s149, 128, %s151, %s138
        $region28: #{tpu_custom_call.1} parent=23 // pred_fallthru
          _
      $region24: #{tpu_custom_call.1} parent=5 // pred_fallthru
        _
      %p154 = scmp.le.s32.totalorder 1, %s15
      %p155 = scmp.lt.s32.totalorder %s15, 3
      %p156 = pnand %p154, %p155
      %p157 = pneg %p156
      // Predicated region
      $region29: #{tpu_custom_call.1} parent=5 // pred_check
        _
      $region30: #{tpu_custom_call.1} parent=5 // pred_check_branch
        %159 = sbr.rel (%p156) target = $region32
      $region31: #{tpu_custom_call.1} parent=5 // pred_region
        %s160 = ssub.s32 %s15, 1
        %s161 = sand.u32 %s70, 1
        %s162 = scalar_lea.sflag [#allocation3], %s161
        %s163 = sand.u32 %s70, 1
        %s164 = smul.addr %s163, 8
        %s165 = scalar_lea.vmem [#allocation2], %s164
        // Predicated region
        $region33: #{tpu_custom_call.1} parent=31 // pred_check
          %p166 = pneg %p83
        $region34: #{tpu_custom_call.1} parent=31 // pred_check_branch
          %168 = sbr.rel (%p166) target = $region36
        $region35: #{tpu_custom_call.1} parent=31 // pred_region
          %170 = dma.done %s162, 128
        $region36: #{tpu_custom_call.1} parent=31 // pred_fallthru
          _
        %p171 = pneg %p36
        %p172 = pneg %p33
        %p173 = pneg %p57
        %p174 = pneg %p54
        %s175 = sand.u32 %s70, 1
        %s176 = scalar_lea.sflag [#allocation3], %s175
        %s177 = sand.u32 %s70, 1
        %s178 = smul.addr %s177, 8
        %s179 = scalar_lea.vmem [#allocation2], %s178
        %p180 = pneg %p83
        %p181 = pneg %p80
        %p182 = pneg %p109
        %p183 = pneg %p106
        %s184 = sand.u32 %s96, 1
        %s185 = scalar_lea.sflag [#allocation4], %s184
        %s186 = sand.u32 %s96, 1
        %s187 = smul.addr %s186, 8
        %s188 = scalar_lea.vmem [#allocation5], %s187
        %v189 = vld [vmem:[%s165] sm:$0xff]
        %191 = vst [vmem:[#allocation1] ss:$2 sm:$0xff] %v189
        %v192 = vld.sshfl [vmem:[#allocation1] sm:$0xff pattern:$0x75316420]
        %v193 = vld.sshfl [vmem:[#allocation1 + $0x8] sm:$0xff pattern:$0x75316420]
        %vm196 = vcmask 1043456
        %v197 = vsel %vm196, %v192, 0.0
        %v198 = vsel %vm196, %v193, 0.0
        %v199 = vadd.f32 %v197, %v198
        %200 = vadd.xlane.f32.xlu0 %v199
        %v201 = vpop.xlane.xlu0 %200
        %v202 = vld [vmem:[%s0] sm:$0xf]
        %v203 = vld [vmem:[%s1] sm:$0xf]
        %vm204 = vcmask 31744
        %v206 = vsel %vm204, %v202, 0
        %v209 = vsel %vm196, %v201, 0
        %211 = vmatpush.msra.mxu0 0.0
        %212 = vmatpush.msra.mxu0 0.0
        %213 = vmatpush.msra.mxu0 0.0
        %214 = vmatpush.msra.mxu0 0.0
        %215 = vmatpush.msra.mxu0 0.0
        %216 = vmatpush.msra.mxu0 0.0
        %217 = vmatpush.msra.mxu0 0.0
        %218 = vmatpush.msra.mxu0 0.0
        %219 = vmatpush.msra.mxu0 0.0
        %220 = vmatpush.msra.mxu0 0.0
        %221 = vmatpush.msra.mxu0 0.0
        %222 = vmatpush.msra.mxu0 0.0
        %223 = vmatpush.msra.mxu0 0.0
        %224 = vmatpush.msra.mxu0 0.0
        %225 = vmatpush.msra.mxu0 0.0
        %226 = vmatpush.msra.mxu0 %v209
        %227 = vmatmul.f32.gmra.mxu0 %v206
        %v228 = vpop.f32.mrf.mxu0
        %v229 = vadd.f32 %v203, %v228
        %230 = vdwg.mxu0
        %v231 = vxor.u32 %v229, 2147483648
        %v232 = vmul.f32 %v231, 1.442695
        %v233 = vpow.pop %v232
        %v234 = vadd.f32 %v233, 1.0
        %v235 = vrcp.pop %v234
        %v236 = vmul.f32 %v234, %v235
        %v237 = vsub.f32 1.0, %v236
        %v238 = vmul.f32 %v235, %v237
        %v239 = vadd.f32 %v235, %v238
        %vm240 = vweird.f32 %v234
        %vm241 = vweird.f32 %v235
        %vm242 = vmor %vm240, %vm241
        %v243 = vsel %vm242, %v235, %v239
        %v244 = vand.u32 2147483647, %v234
        %vm245 = vcmp.eq.f32.partialorder %v244, 8.507059e+37
        %v246 = vand.u32 %v234, 2147483648
        %v247 = vor.u32 1.1754944e-38, %v246
        %v248 = vsel %vm245, %v247, %v243
        %v249 = vmul.f32 1.0, %v248
        %251 = vset.pattern.permute.xlu0 0
        %252 = vperm.xlu0 %251, %v249
        %v253 = vpop.permute.xlu0 %252
        %v255 = vunpack.c.l.s4 839922192
        %v256 = vunpack.c.0.s8 %v255
        %v257 = vperm.slane %v253, %v256
        %v259 = vmul.f32 %v189, %v257
        %260 = vst [vmem:[%s188] sm:$0xff] %v259
        %s261 = sand.u32 %s96, 1
        %s262 = scalar_lea.sflag [#allocation4], %s261
        %s263 = sand.u32 %s96, 1
        %s264 = smul.addr %s263, 8
        %s265 = scalar_lea.vmem [#allocation5], %s264
        // Predicated region
        $region37: #{tpu_custom_call.1} parent=31 // pred_check
          %p266 = pneg %p106
        $region38: #{tpu_custom_call.1} parent=31 // pred_check_branch
          %268 = sbr.rel (%p266) target = $region40
        $region39: #{tpu_custom_call.1} parent=31 // pred_region
          %270 = vsyncadd %s262, 0
          %s271 = smul.addr %s20, 2
          %s272 = smul.addr %s271, 4
          %s273 = scalar_lea.hbm %s3, %s272
          %s275 = sshll.u32 %s265, 4
          %s276 = int_to_ptr.vmem [resolvable:$true] %s275
          %s277 = sshll.u32 %s273, 4
          %s278 = int_to_ptr.hbm [resolvable:$true] %s277
          %280 = dma.vmem_to_hbm [thread:$0]  %s276, 128, %s278, %s262
        $region40: #{tpu_custom_call.1} parent=31 // pred_fallthru
          _
      $region32: #{tpu_custom_call.1} parent=5 // pred_fallthru
        _
      %p281 = scmp.le.s32.totalorder 2, %s15
      // Predicated region
      $region41: #{tpu_custom_call.1} parent=5 // pred_check
        %p282 = pneg %p281
      $region42: #{tpu_custom_call.1} parent=5 // pred_check_branch
        %284 = sbr.rel (%p282) target = $region44
      $region43: #{tpu_custom_call.1} parent=5 // pred_region
        %s285 = ssub.s32 %s15, 2
        // Predicated region
        $region45: #{tpu_custom_call.1} parent=43 // pred_check
          %p286 = pneg %p112
        $region46: #{tpu_custom_call.1} parent=43 // pred_check_branch
          %288 = sbr.rel (%p286) target = $region48
        $region47: #{tpu_custom_call.1} parent=43 // pred_region
          %s289 = sand.u32 %s97, 1
          %s290 = scalar_lea.sflag [#allocation4], %s289
          %s291 = sand.u32 %s97, 1
          %s292 = smul.addr %s291, 8
          %s293 = scalar_lea.vmem [#allocation5], %s292
          %295 = dma.done %s290, 128
        $region48: #{tpu_custom_call.1} parent=43 // pred_fallthru
          _
      $region44: #{tpu_custom_call.1} parent=5 // pred_fallthru
        _
    $region6: #{tpu_custom_call.1} parent=1 // loop_footer
      %s19 = sadd.s32 1, %s15
    $region7: #{tpu_custom_call.1} parent=1 // loop_footer_branch
      %14 = sbr.rel target = $region3
    $region8: #{tpu_custom_call.1} parent=1 // loop_exit
      _
    %296 = vsyncpa [#allocation3], 1
    %s297 = scalar_lea.sflag [#allocation3], 1
    %298 = vsyncpa %s297, 1
    %299 = vsyncpa [#allocation4], 1
    %s300 = scalar_lea.sflag [#allocation4], 1
    %301 = vsyncpa %s300, 1

</llo_original>
